<compile_context>
chip_gen: v7x
topology: tpu7x:2x2x1
jax: 0.10.0
libtpu: 0.0.40
codegen_flags: <defaults>
</compile_context>

<pallas_src>
import jax
import jax.numpy as jnp
from jax.experimental import pallas as pl
from jax.experimental.pallas import tpu as pltpu


_SMALL_TOTAL = 1 << 17            # below this many elements, plain XLA wins
_TARGET_TILE_BYTES = 4 << 20      # ~4 MiB per pipeline buffer
_LANE_CHOICES = (1024, 512, 256, 128)  # lane-dense widths, prefer the widest


def _affine_kernel(params_ref, x_ref, o_ref):
    # params_ref: SMEM (2,) f32 = [a, c] with a = w_reg*w_custom, c = b_reg*w_custom
    a = params_ref[0]
    c = params_ref[1]
    xv = x_ref[...].astype(jnp.float32)          # native-dtype stream, f32 math
    o_ref[...] = (xv * a + c).astype(o_ref.dtype)


def _pallas_affine_2d(x2d, params, block_rows):
    rows, lane = x2d.shape
    grid = (pl.cdiv(rows, block_rows),)          # ragged last block handled by Pallas
    return pl.pallas_call(
        _affine_kernel,
        out_shape=jax.ShapeDtypeStruct(x2d.shape, x2d.dtype),
        grid=grid,
        in_specs=[
            pl.BlockSpec(memory_space=pltpu.MemorySpace.SMEM),      # [a, c] scalars
            pl.BlockSpec((block_rows, lane), lambda i: (i, 0)),     # pipelined tile
        ],
        out_specs=pl.BlockSpec((block_rows, lane), lambda i: (i, 0)),
        compiler_params=pltpu.CompilerParams(
            dimension_semantics=("parallel",),   # megacore sharding on v7x
            vmem_limit_bytes=48 << 20,           # room for 4 x ~4 MiB buffers
        ),
    )(params, x2d)


def model_with_custom_conv_modules(x, w_reg, b_reg, w_custom):
    """x: (N, 1, H, W). Returns (N, 1, H, W) in x's dtype.

    Equivalent to:
        y = conv2d(x, w_reg[1,1,1,1]) + b_reg     # regular_conv (1x1, bias)
        y = conv2d(y, w_custom[1,1,1,1])          # custom_conv  (1x1, no bias)
    """
    orig_shape = x.shape
    dtype = x.dtype
    total = x.size

    # Fold three scalars into two on the host (touches only 3 scalars).
    a = (w_reg.reshape(()) * w_custom.reshape(())).astype(jnp.float32)
    c = (b_reg.reshape(()) * w_custom.reshape(())).astype(jnp.float32)

    # Small-input fast path: launch/plumbing overhead dominates a pallas_call.
    if total < _SMALL_TOTAL:
        return (x.astype(jnp.float32) * a + c).astype(dtype)

    params = jnp.stack([a, c])

    flat = x.reshape(-1)                          # free bitcast (row-major)
    tail = total % 128                            # <128 unaligned trailing elements
    main = total - tail                           # 128-aligned prefix length
    lane = next(l for l in _LANE_CHOICES if main % l == 0)   # 128 always divides
    rows = main // lane

    # Constant-byte tiles: ~4 MiB per buffer, rows a multiple of 8.
    itemsize = x.dtype.itemsize
    target_rows = max(8, (_TARGET_TILE_BYTES // (lane * itemsize)) // 8 * 8)
    if rows > target_rows:
        block_rows = target_rows
    elif rows >= 16:
        # Split into >=2 grid steps so both v7x TensorCores get work.
        block_rows = (((rows + 1) // 2) + 7) // 8 * 8
    else:
        block_rows = rows                         # full extent -> always legal

    x2d = (flat[:main] if tail else flat).reshape(rows, lane)
    out_main = _pallas_affine_2d(x2d, params, block_rows).reshape(-1)

    if tail:
        # Tiny (<128 element) tail handled by XLA; only this rare unaligned case
        # pays for the stitch.
        tail_out = (flat[main:].astype(jnp.float32) * a + c).astype(dtype)
        out_flat = jnp.concatenate([out_main, tail_out])
    else:
        out_flat = out_main

    return out_flat.reshape(orig_shape)


if __name__ == "__main__":
    key = jax.random.PRNGKey(0)
    kx, kw, kb, kx2, kx3, kc = jax.random.split(key, 6)

    # Parameters consistent with the module definition.
    # regular_conv = Conv2d(1, 1, 1): weight [1,1,1,1], bias [1]
    w_reg = jax.random.normal(kw, (1, 1, 1, 1), dtype=jnp.float32)
    b_reg = jax.random.normal(kb, (1,), dtype=jnp.float32)
    # CustomConvModule weight is initialized to ones([1,1,1,1]).
    w_custom = jnp.ones((1, 1, 1, 1), dtype=jnp.float32)

    def ref_fn(xx, wr, br, wc):
        return (xx * wr[0, 0, 0, 0] + br[0]) * wc[0, 0, 0, 0]

    # 1) Tiny module-shaped input (N, 1, H, W) -> XLA fast path.
    x = jax.random.normal(kx, (2, 1, 16, 16), dtype=jnp.float32)
    out = jax.block_until_ready(
        model_with_custom_conv_modules(x, w_reg, b_reg, w_custom))
    assert out.shape == (2, 1, 16, 16)
    assert jnp.allclose(out, ref_fn(x, w_reg, b_reg, w_custom), atol=1e-5, rtol=1e-5)

    # 2) Lane-aligned input -> Pallas path with a 2-step pipelined grid.
    x_big = jax.random.normal(kx2, (1, 1, 512, 512), dtype=jnp.float32)
    out_big = jax.block_until_ready(
        model_with_custom_conv_modules(x_big, w_reg, b_reg, w_custom))
    assert jnp.allclose(out_big, ref_fn(x_big, w_reg, b_reg, w_custom),
                        atol=1e-5, rtol=1e-5)

    # 3) Non-128-aligned element count + non-unit custom weight
    #    -> ragged last block in the kernel + tiny XLA tail.
    w_custom2 = jax.random.normal(kc, (1, 1, 1, 1), dtype=jnp.float32)
    x_odd = jax.random.normal(kx3, (1, 1, 513, 517), dtype=jnp.float32)
    out_odd = jax.block_until_ready(
        model_with_custom_conv_modules(x_odd, w_reg, b_reg, w_custom2))
    assert jnp.allclose(out_odd, ref_fn(x_odd, w_reg, b_reg, w_custom2),
                        atol=1e-5, rtol=1e-5)

    print("KERNEL_OK")
</pallas_src>

<mosaic_0001>
module attributes {stable_mosaic.version = 11 : i64} {
  func.func @_affine_kernel(%arg0: i32, %arg1: memref<2xf32, #tpu.memory_space<smem>>, %arg2: memref<128x1024xf32, #tpu.memory_space<vmem>>, %arg3: memref<128x1024xf32, #tpu.memory_space<vmem>>) attributes {dimension_semantics = [#tpu.dimension_semantics<parallel>], iteration_bounds = array<i64: 2>, scalar_prefetch = 0 : i64, scratch_operands = 0 : i64, tpu.core_type = #tpu.core_type<tc>, window_params = [{transform_indices = @transform_0, window_bounds = array<i64: 2>}, {transform_indices = @transform_1, window_bounds = array<i64: 128, 1024>}, {transform_indices = @transform_2, window_bounds = array<i64: 128, 1024>}]} {
    %c0 = arith.constant 0 : index
    %0 = memref.load %arg1[%c0] : memref<2xf32, #tpu.memory_space<smem>>
    %c1 = arith.constant 1 : index
    %1 = memref.load %arg1[%c1] : memref<2xf32, #tpu.memory_space<smem>>
    %c0_0 = arith.constant 0 : index
    %c0_1 = arith.constant 0 : index
    %2 = vector.load %arg2[%c0_0, %c0_1] : memref<128x1024xf32, #tpu.memory_space<vmem>>, vector<128x1024xf32>
    %3 = vector.broadcast %0 : f32 to vector<128x1024xf32>
    %4 = arith.mulf %2, %3 : vector<128x1024xf32>
    %5 = vector.broadcast %1 : f32 to vector<128x1024xf32>
    %6 = arith.addf %4, %5 : vector<128x1024xf32>
    %c0_2 = arith.constant 0 : index
    %c0_3 = arith.constant 0 : index
    %7 = vector.load %arg3[%c0_2, %c0_3] : memref<128x1024xf32, #tpu.memory_space<vmem>>, vector<128x1024xf32>
    tpu.vector_store %arg3[%c0_2, %c0_3], %6 {strides = array<i32>} : memref<128x1024xf32, #tpu.memory_space<vmem>>, vector<128x1024xf32>,
    return
  }
  func.func @transform_0(%arg0: i32) -> i32 {
    %c0_i32 = arith.constant 0 : i32
    %c0_i32_0 = arith.constant 0 : i32
    return %c0_i32 : i32
  }
  func.func @transform_1(%arg0: i32) -> (i32, i32) {
    %c0_i32 = arith.constant 0 : i32
    %c0_i32_0 = arith.constant 0 : i32
    return %arg0, %c0_i32 : i32, i32
  }
  func.func @transform_2(%arg0: i32) -> (i32, i32) {
    %c0_i32 = arith.constant 0 : i32
    %c0_i32_0 = arith.constant 0 : i32
    return %arg0, %c0_i32 : i32, i32
  }
}

</mosaic_0001>

<llo_original>
// kernel: tpu_custom_call.1
$region0: #{tpu_custom_call.1}
  #allocation0 [shape = 'u32[]', space=smem, size = 0x4, offset = 0x4, fixed_abs, tag = 'smem constant byte address 0x4 - core index']
  #allocation1 [shape = 'u32[144,128]{1,0:T(1,128)}', space=vmem, size = 0x12000, scoped, tag = 'internal scratch']
  %s0 = inlined_call_operand.hbm [shape: f32[2], index: 0, kind: input, shape index: {}]
  %s1 = inlined_call_operand.hbm [shape: f32[256,1024], index: 1, kind: input, shape index: {}]
  %s2 = inlined_call_operand.hbm [shape: f32[256,1024], index: 2, kind: output, shape index: {}]
  %s3 = sld [smem:[#allocation0]]
  $region49: #{tpu_custom_call.1} parent=0
    _
  %s5 = ssub.s32 1, %s3
  %s6 = scalar_select 0, %s5, %s3
  $region1: #{tpu_custom_call.1} parent=0
    #allocation2 [shape = 'u8[512]{0}', space=smem, size = 0x200, scoped, tag = 'input window, operand 0, single buffered']
    #allocation3 [shape = 's32[2]{0}', space=sflag, size = 0x8, scoped, tag = 'scoped memory for tpu_custom_call.1']
    #allocation4 [shape = 's32[2]{0}', space=sflag, size = 0x8, scoped, tag = 'scoped memory for tpu_custom_call.1']
    #allocation5 [shape = 's32[2]{0}', space=sflag, size = 0x8, scoped, tag = 'scoped memory for tpu_custom_call.1']
    #allocation6 [shape = 'u8[1048576]{0}', space=vmem, size = 0x100000, scoped, tag = 'input window, operand 1']
    #allocation7 [shape = 'u8[1048576]{0}', space=vmem, size = 0x100000, scoped, tag = 'output window, operand 0']
    %7 = vsyncpa [#allocation5], 0
    %8 = vsyncpa [#allocation3], 0
    %s9 = scalar_lea.sflag [#allocation3], 1
    %10 = vsyncpa %s9, 0
    %11 = vsyncpa [#allocation4], 0
    %s12 = scalar_lea.sflag [#allocation4], 1
    %13 = vsyncpa %s12, 0
    loop: start=0, step=1, limit=4
    $region2: #{tpu_custom_call.1} parent=1 // loop_pre_header
      _
    $region3: #{tpu_custom_call.1} parent=1 // loop_header
      %s15 = sphi 0, %s19
      %p16 = scmp.ge.s32.totalorder %s15, 4
      %s23 = sphi 0, %s23
      %s25 = sphi 0, %s23
      %s26 = sphi 0, %s25
      %s40 = sphi 0, %s26
      %s46 = sphi 0, %s48
      %s49 = sphi 0, %s46
      %s50 = sphi 0, %s49
      %s66 = sphi 0, %s50
      %s72 = sphi 0, %s74
      %s75 = sphi 0, %s72
      %s76 = sphi 0, %s75
      %s92 = sphi 0, %s76
    $region4: #{tpu_custom_call.1} parent=1 // loop_header_branch
      %18 = sbr.rel (%p16) target = $region8
    $region5: #{tpu_custom_call.1} parent=1 // loop_body
      %s20 = ssub.s32 %s15, 1
      %s21 = ssub.s32 %s15, 2
      %s22 = sadd.s32 %s15, 1
      %s24 = sadd.s32 %s23, 1
      %p27 = scmp.eq.s32.totalorder %s15, 1
      %p28 = scmp.ne.s32.totalorder %s23, %s25
      %p29 = scmp.eq.s32.totalorder %s15, 0
      %p30 = por %p28, %p29
      %p31 = scmp.ne.s32.totalorder %s23, %s25
      %p32 = scmp.eq.s32.totalorder %s20, 1
      %p33 = por %p31, %p32
      %p34 = scmp.ne.s32.totalorder %s25, %s26
      %p35 = scmp.eq.s32.totalorder %s20, 0
      %p36 = por %p34, %p35
      %p37 = scmp.ne.s32.totalorder %s25, %s26
      %p38 = scmp.eq.s32.totalorder %s21, 1
      %p39 = por %p37, %p38
      %p41 = scmp.ne.s32.totalorder %s26, %s40
      %p42 = scmp.eq.s32.totalorder %s21, 0
      %p43 = por %p41, %p42
      %s44 = ssub.s32 %s15, %s22
      %p45 = scmp.eq.s32.totalorder %s44, 0
      %s47 = sadd.s32 %s46, 1
      %s48 = scalar_select %p45, %s46, %s47
      %p51 = pneg %p45
      %p52 = scmp.eq.s32.totalorder %s15, 1
      %p53 = por %p51, %p52
      %p54 = scmp.ne.s32.totalorder %s46, %s49
      %p55 = scmp.eq.s32.totalorder %s15, 0
      %p56 = por %p54, %p55
      %p57 = scmp.ne.s32.totalorder %s46, %s49
      %p58 = scmp.eq.s32.totalorder %s20, 1
      %p59 = por %p57, %p58
      %p60 = scmp.ne.s32.totalorder %s49, %s50
      %p61 = scmp.eq.s32.totalorder %s20, 0
      %p62 = por %p60, %p61
      %p63 = scmp.ne.s32.totalorder %s49, %s50
      %p64 = scmp.eq.s32.totalorder %s21, 1
      %p65 = por %p63, %p64
      %p67 = scmp.ne.s32.totalorder %s50, %s66
      %p68 = scmp.eq.s32.totalorder %s21, 0
      %p69 = por %p67, %p68
      %s70 = ssub.s32 %s15, %s22
      %p71 = scmp.eq.s32.totalorder %s70, 0
      %s73 = sadd.s32 %s72, 1
      %s74 = scalar_select %p71, %s72, %s73
      %p77 = pneg %p71
      %p78 = scmp.eq.s32.totalorder %s15, 1
      %p79 = por %p77, %p78
      %p80 = scmp.ne.s32.totalorder %s72, %s75
      %p81 = scmp.eq.s32.totalorder %s15, 0
      %p82 = por %p80, %p81
      %p83 = scmp.ne.s32.totalorder %s72, %s75
      %p84 = scmp.eq.s32.totalorder %s20, 1
      %p85 = por %p83, %p84
      %p86 = scmp.ne.s32.totalorder %s75, %s76
      %p87 = scmp.eq.s32.totalorder %s20, 0
      %p88 = por %p86, %p87
      %p89 = scmp.ne.s32.totalorder %s75, %s76
      %p90 = scmp.eq.s32.totalorder %s21, 1
      %p91 = por %p89, %p90
      %p93 = scmp.ne.s32.totalorder %s76, %s92
      %p94 = scmp.eq.s32.totalorder %s21, 0
      %p95 = por %p93, %p94
      %p96 = scmp.le.s32.totalorder 1, %s15
      %p97 = scmp.lt.s32.totalorder %s15, 3
      %p98 = pnand %p96, %p97
      %p99 = pneg %p98
      // Predicated region
      $region9: #{tpu_custom_call.1} parent=5 // pred_check
        _
      $region10: #{tpu_custom_call.1} parent=5 // pred_check_branch
        %101 = sbr.rel (%p98) target = $region12
      $region11: #{tpu_custom_call.1} parent=5 // pred_region
        %s102 = ssub.s32 %s15, 1
        // Predicated region
        $region13: #{tpu_custom_call.1} parent=11 // pred_check
          %p103 = pneg %p36
        $region14: #{tpu_custom_call.1} parent=11 // pred_check_branch
          %105 = sbr.rel (%p103) target = $region16
        $region15: #{tpu_custom_call.1} parent=11 // pred_region
          %s107 = ssub.s32 16, 16
          %108 = vsyncadd [#allocation5], %s107
          %111 = dma.hbm_to_smem %s0, 16, [#allocation2], [#allocation5]
        $region16: #{tpu_custom_call.1} parent=11 // pred_fallthru
          _
      $region12: #{tpu_custom_call.1} parent=5 // pred_fallthru
        _
      %p112 = scmp.lt.s32.totalorder %s15, 2
      // Predicated region
      $region17: #{tpu_custom_call.1} parent=5 // pred_check
        %p113 = pneg %p112
      $region18: #{tpu_custom_call.1} parent=5 // pred_check_branch
        %115 = sbr.rel (%p113) target = $region20
      $region19: #{tpu_custom_call.1} parent=5 // pred_region
        // Predicated region
        $region21: #{tpu_custom_call.1} parent=19 // pred_check
          %p116 = pneg %p56
        $region22: #{tpu_custom_call.1} parent=19 // pred_check_branch
          %118 = sbr.rel (%p116) target = $region24
        $region23: #{tpu_custom_call.1} parent=19 // pred_region
          %s119 = sand.u32 %s46, 1
          %s120 = scalar_lea.sflag [#allocation3], %s119
          %s121 = sand.u32 %s46, 1
          %s122 = smul.addr %s121, 1024
          %s123 = scalar_lea.vmem [#allocation6], %s122
          %s124 = smul.u32 16, %s15
          %s126 = ssub.s32 16384, 16384
          %127 = vsyncadd %s120, %s126
          %s128 = smul.addr %s124, 8
          %s129 = smul.addr %s128, 128
          %s130 = scalar_lea.hbm %s1, %s129
          %s131 = sshll.u32 %s123, 4
          %s132 = int_to_ptr.vmem [resolvable:$true] %s131
          %137 = dma.hbm_to_vmem [thread:$0]  %s130, 16384, %s132, %s120, 1024, 1024, 64
        $region24: #{tpu_custom_call.1} parent=19 // pred_fallthru
          _
      $region20: #{tpu_custom_call.1} parent=5 // pred_fallthru
        _
      %p138 = scmp.le.s32.totalorder 1, %s15
      %p139 = scmp.lt.s32.totalorder %s15, 3
      %p140 = pnand %p138, %p139
      %p141 = pneg %p140
      // Predicated region
      $region25: #{tpu_custom_call.1} parent=5 // pred_check
        _
      $region26: #{tpu_custom_call.1} parent=5 // pred_check_branch
        %143 = sbr.rel (%p140) target = $region28
      $region27: #{tpu_custom_call.1} parent=5 // pred_region
        %s144 = ssub.s32 %s15, 1
        // Predicated region
        $region29: #{tpu_custom_call.1} parent=27 // pred_check
          %p145 = pneg %p36
        $region30: #{tpu_custom_call.1} parent=27 // pred_check_branch
          %147 = sbr.rel (%p145) target = $region32
        $region31: #{tpu_custom_call.1} parent=27 // pred_region
          %148 = dma.done [#allocation5], 16
        $region32: #{tpu_custom_call.1} parent=27 // pred_fallthru
          _
        %s149 = sand.u32 %s49, 1
        %s150 = scalar_lea.sflag [#allocation3], %s149
        %s151 = sand.u32 %s49, 1
        %s152 = smul.addr %s151, 1024
        %s153 = scalar_lea.vmem [#allocation6], %s152
        // Predicated region
        $region33: #{tpu_custom_call.1} parent=27 // pred_check
          %p154 = pneg %p62
        $region34: #{tpu_custom_call.1} parent=27 // pred_check_branch
          %156 = sbr.rel (%p154) target = $region36
        $region35: #{tpu_custom_call.1} parent=27 // pred_region
          %157 = dma.done %s150, 16384
        $region36: #{tpu_custom_call.1} parent=27 // pred_fallthru
          _
        %158 = sfence
        %p159 = pneg %p36
        %p160 = pneg %p33
        %s161 = sand.u32 %s49, 1
        %s162 = scalar_lea.sflag [#allocation3], %s161
        %s163 = sand.u32 %s49, 1
        %s164 = smul.addr %s163, 1024
        %s165 = scalar_lea.vmem [#allocation6], %s164
        %p166 = pneg %p62
        %p167 = pneg %p59
        %p168 = pneg %p88
        %p169 = pneg %p85
        %s170 = sand.u32 %s75, 1
        %s171 = scalar_lea.sflag [#allocation4], %s170
        %s172 = sand.u32 %s75, 1
        %s173 = smul.addr %s172, 1024
        %s174 = scalar_lea.vmem [#allocation7], %s173
        %s175 = smul.u32 16, %s20
        %s176 = smul.u32 16, %s20
        %s177 = sld [smem:[#allocation2]]
        %s178 = sld [smem:[#allocation2 + $0x1]]
        %v179 = vld [vmem:[%s153] sm:$0xff]
        %v180 = vld [vmem:[%s153 + $0x8] sm:$0xff]
        %v181 = vld [vmem:[%s153 + $0x10] sm:$0xff]
        %v182 = vld [vmem:[%s153 + $0x18] sm:$0xff]
        %v183 = vld [vmem:[%s153 + $0x20] sm:$0xff]
        %v184 = vld [vmem:[%s153 + $0x28] sm:$0xff]
        %v185 = vld [vmem:[%s153 + $0x30] sm:$0xff]
        %v186 = vld [vmem:[%s153 + $0x38] sm:$0xff]
        %v187 = vld [vmem:[%s153 + $0x40] sm:$0xff]
        %v188 = vld [vmem:[%s153 + $0x48] sm:$0xff]
        %v189 = vld [vmem:[%s153 + $0x50] sm:$0xff]
        %v190 = vld [vmem:[%s153 + $0x58] sm:$0xff]
        %v191 = vld [vmem:[%s153 + $0x60] sm:$0xff]
        %v192 = vld [vmem:[%s153 + $0x68] sm:$0xff]
        %v193 = vld [vmem:[%s153 + $0x70] sm:$0xff]
        %v194 = vld [vmem:[%s153 + $0x78] sm:$0xff]
        %v195 = vld [vmem:[%s153 + $0x80] sm:$0xff]
        %v196 = vld [vmem:[%s153 + $0x88] sm:$0xff]
        %v197 = vld [vmem:[%s153 + $0x90] sm:$0xff]
        %v198 = vld [vmem:[%s153 + $0x98] sm:$0xff]
        %v199 = vld [vmem:[%s153 + $0xa0] sm:$0xff]
        %v200 = vld [vmem:[%s153 + $0xa8] sm:$0xff]
        %v201 = vld [vmem:[%s153 + $0xb0] sm:$0xff]
        %v202 = vld [vmem:[%s153 + $0xb8] sm:$0xff]
        %v203 = vld [vmem:[%s153 + $0xc0] sm:$0xff]
        %v204 = vld [vmem:[%s153 + $0xc8] sm:$0xff]
        %v205 = vld [vmem:[%s153 + $0xd0] sm:$0xff]
        %v206 = vld [vmem:[%s153 + $0xd8] sm:$0xff]
        %v207 = vld [vmem:[%s153 + $0xe0] sm:$0xff]
        %v208 = vld [vmem:[%s153 + $0xe8] sm:$0xff]
        %v209 = vld [vmem:[%s153 + $0xf0] sm:$0xff]
        %v210 = vld [vmem:[%s153 + $0xf8] sm:$0xff]
        %v211 = vld [vmem:[%s153 + $0x100] sm:$0xff]
        %v212 = vld [vmem:[%s153 + $0x108] sm:$0xff]
        %v213 = vld [vmem:[%s153 + $0x110] sm:$0xff]
        %v214 = vld [vmem:[%s153 + $0x118] sm:$0xff]
        %v215 = vld [vmem:[%s153 + $0x120] sm:$0xff]
        %v216 = vld [vmem:[%s153 + $0x128] sm:$0xff]
        %v217 = vld [vmem:[%s153 + $0x130] sm:$0xff]
        %v218 = vld [vmem:[%s153 + $0x138] sm:$0xff]
        %v219 = vld [vmem:[%s153 + $0x140] sm:$0xff]
        %v220 = vld [vmem:[%s153 + $0x148] sm:$0xff]
        %v221 = vld [vmem:[%s153 + $0x150] sm:$0xff]
        %v222 = vld [vmem:[%s153 + $0x158] sm:$0xff]
        %v223 = vld [vmem:[%s153 + $0x160] sm:$0xff]
        %v224 = vld [vmem:[%s153 + $0x168] sm:$0xff]
        %v225 = vld [vmem:[%s153 + $0x170] sm:$0xff]
        %v226 = vld [vmem:[%s153 + $0x178] sm:$0xff]
        %v227 = vld [vmem:[%s153 + $0x180] sm:$0xff]
        %v228 = vld [vmem:[%s153 + $0x188] sm:$0xff]
        %v229 = vld [vmem:[%s153 + $0x190] sm:$0xff]
        %v230 = vld [vmem:[%s153 + $0x198] sm:$0xff]
        %v231 = vld [vmem:[%s153 + $0x1a0] sm:$0xff]
        %v232 = vld [vmem:[%s153 + $0x1a8] sm:$0xff]
        %v233 = vld [vmem:[%s153 + $0x1b0] sm:$0xff]
        %v234 = vld [vmem:[%s153 + $0x1b8] sm:$0xff]
        %v235 = vld [vmem:[%s153 + $0x1c0] sm:$0xff]
        %v236 = vld [vmem:[%s153 + $0x1c8] sm:$0xff]
        %v237 = vld [vmem:[%s153 + $0x1d0] sm:$0xff]
        %v238 = vld [vmem:[%s153 + $0x1d8] sm:$0xff]
        %v239 = vld [vmem:[%s153 + $0x1e0] sm:$0xff]
        %v240 = vld [vmem:[%s153 + $0x1e8] sm:$0xff]
        %v241 = vld [vmem:[%s153 + $0x1f0] sm:$0xff]
        %v242 = vld [vmem:[%s153 + $0x1f8] sm:$0xff]
        %v243 = vld [vmem:[%s153 + $0x200] sm:$0xff]
        %v244 = vld [vmem:[%s153 + $0x208] sm:$0xff]
        %v245 = vld [vmem:[%s153 + $0x210] sm:$0xff]
        %v246 = vld [vmem:[%s153 + $0x218] sm:$0xff]
        %v247 = vld [vmem:[%s153 + $0x220] sm:$0xff]
        %v248 = vld [vmem:[%s153 + $0x228] sm:$0xff]
        %v249 = vld [vmem:[%s153 + $0x230] sm:$0xff]
        %v250 = vld [vmem:[%s153 + $0x238] sm:$0xff]
        %v251 = vld [vmem:[%s153 + $0x240] sm:$0xff]
        %v252 = vld [vmem:[%s153 + $0x248] sm:$0xff]
        %v253 = vld [vmem:[%s153 + $0x250] sm:$0xff]
        %v254 = vld [vmem:[%s153 + $0x258] sm:$0xff]
        %v255 = vld [vmem:[%s153 + $0x260] sm:$0xff]
        %v256 = vld [vmem:[%s153 + $0x268] sm:$0xff]
        %v257 = vld [vmem:[%s153 + $0x270] sm:$0xff]
        %v258 = vld [vmem:[%s153 + $0x278] sm:$0xff]
        %v259 = vld [vmem:[%s153 + $0x280] sm:$0xff]
        %v260 = vld [vmem:[%s153 + $0x288] sm:$0xff]
        %v261 = vld [vmem:[%s153 + $0x290] sm:$0xff]
        %v262 = vld [vmem:[%s153 + $0x298] sm:$0xff]
        %v263 = vld [vmem:[%s153 + $0x2a0] sm:$0xff]
        %v264 = vld [vmem:[%s153 + $0x2a8] sm:$0xff]
        %v265 = vld [vmem:[%s153 + $0x2b0] sm:$0xff]
        %v266 = vld [vmem:[%s153 + $0x2b8] sm:$0xff]
        %v267 = vld [vmem:[%s153 + $0x2c0] sm:$0xff]
        %v268 = vld [vmem:[%s153 + $0x2c8] sm:$0xff]
        %v269 = vld [vmem:[%s153 + $0x2d0] sm:$0xff]
        %v270 = vld [vmem:[%s153 + $0x2d8] sm:$0xff]
        %v271 = vld [vmem:[%s153 + $0x2e0] sm:$0xff]
        %v272 = vld [vmem:[%s153 + $0x2e8] sm:$0xff]
        %v273 = vld [vmem:[%s153 + $0x2f0] sm:$0xff]
        %v274 = vld [vmem:[%s153 + $0x2f8] sm:$0xff]
        %v275 = vld [vmem:[%s153 + $0x300] sm:$0xff]
        %v276 = vld [vmem:[%s153 + $0x308] sm:$0xff]
        %v277 = vld [vmem:[%s153 + $0x310] sm:$0xff]
        %v278 = vld [vmem:[%s153 + $0x318] sm:$0xff]
        %v279 = vld [vmem:[%s153 + $0x320] sm:$0xff]
        %v280 = vld [vmem:[%s153 + $0x328] sm:$0xff]
        %v281 = vld [vmem:[%s153 + $0x330] sm:$0xff]
        %v282 = vld [vmem:[%s153 + $0x338] sm:$0xff]
        %v283 = vld [vmem:[%s153 + $0x340] sm:$0xff]
        %v284 = vld [vmem:[%s153 + $0x348] sm:$0xff]
        %v285 = vld [vmem:[%s153 + $0x350] sm:$0xff]
        %v286 = vld [vmem:[%s153 + $0x358] sm:$0xff]
        %v287 = vld [vmem:[%s153 + $0x360] sm:$0xff]
        %v288 = vld [vmem:[%s153 + $0x368] sm:$0xff]
        %v289 = vld [vmem:[%s153 + $0x370] sm:$0xff]
        %v290 = vld [vmem:[%s153 + $0x378] sm:$0xff]
        %v291 = vld [vmem:[%s153 + $0x380] sm:$0xff]
        %v292 = vld [vmem:[%s153 + $0x388] sm:$0xff]
        %v293 = vld [vmem:[%s153 + $0x390] sm:$0xff]
        %v294 = vld [vmem:[%s153 + $0x398] sm:$0xff]
        %v295 = vld [vmem:[%s153 + $0x3a0] sm:$0xff]
        %v296 = vld [vmem:[%s153 + $0x3a8] sm:$0xff]
        %v297 = vld [vmem:[%s153 + $0x3b0] sm:$0xff]
        %v298 = vld [vmem:[%s153 + $0x3b8] sm:$0xff]
        %v299 = vld [vmem:[%s153 + $0x3c0] sm:$0xff]
        %v300 = vld [vmem:[%s153 + $0x3c8] sm:$0xff]
        %v301 = vld [vmem:[%s153 + $0x3d0] sm:$0xff]
        %v302 = vld [vmem:[%s153 + $0x3d8] sm:$0xff]
        %v303 = vld [vmem:[%s153 + $0x3e0] sm:$0xff]
        %v304 = vld [vmem:[%s153 + $0x3e8] sm:$0xff]
        %v305 = vld [vmem:[%s153 + $0x3f0] sm:$0xff]
        %v306 = vld [vmem:[%s153 + $0x3f8] sm:$0xff]
        %v307 = vstv %s177
        %v308 = vmul.f32 %v179, %v307
        %v309 = vmul.f32 %v180, %v307
        %v310 = vmul.f32 %v181, %v307
        %v311 = vmul.f32 %v182, %v307
        %v312 = vmul.f32 %v183, %v307
        %v313 = vmul.f32 %v184, %v307
        %v314 = vmul.f32 %v185, %v307
        %v315 = vmul.f32 %v186, %v307
        %v316 = vmul.f32 %v187, %v307
        %v317 = vmul.f32 %v188, %v307
        %v318 = vmul.f32 %v189, %v307
        %v319 = vmul.f32 %v190, %v307
        %v320 = vmul.f32 %v191, %v307
        %v321 = vmul.f32 %v192, %v307
        %v322 = vmul.f32 %v193, %v307
        %v323 = vmul.f32 %v194, %v307
        %v324 = vmul.f32 %v195, %v307
        %v325 = vmul.f32 %v196, %v307
        %v326 = vmul.f32 %v197, %v307
        %v327 = vmul.f32 %v198, %v307
        %v328 = vmul.f32 %v199, %v307
        %v329 = vmul.f32 %v200, %v307
        %v330 = vmul.f32 %v201, %v307
        %v331 = vmul.f32 %v202, %v307
        %v332 = vmul.f32 %v203, %v307
        %v333 = vmul.f32 %v204, %v307
        %v334 = vmul.f32 %v205, %v307
        %v335 = vmul.f32 %v206, %v307
        %v336 = vmul.f32 %v207, %v307
        %v337 = vmul.f32 %v208, %v307
        %v338 = vmul.f32 %v209, %v307
        %v339 = vmul.f32 %v210, %v307
        %v340 = vmul.f32 %v211, %v307
        %v341 = vmul.f32 %v212, %v307
        %v342 = vmul.f32 %v213, %v307
        %v343 = vmul.f32 %v214, %v307
        %v344 = vmul.f32 %v215, %v307
        %v345 = vmul.f32 %v216, %v307
        %v346 = vmul.f32 %v217, %v307
        %v347 = vmul.f32 %v218, %v307
        %v348 = vmul.f32 %v219, %v307
        %v349 = vmul.f32 %v220, %v307
        %v350 = vmul.f32 %v221, %v307
        %v351 = vmul.f32 %v222, %v307
        %v352 = vmul.f32 %v223, %v307
        %v353 = vmul.f32 %v224, %v307
        %v354 = vmul.f32 %v225, %v307
        %v355 = vmul.f32 %v226, %v307
        %v356 = vmul.f32 %v227, %v307
        %v357 = vmul.f32 %v228, %v307
        %v358 = vmul.f32 %v229, %v307
        %v359 = vmul.f32 %v230, %v307
        %v360 = vmul.f32 %v231, %v307
        %v361 = vmul.f32 %v232, %v307
        %v362 = vmul.f32 %v233, %v307
        %v363 = vmul.f32 %v234, %v307
        %v364 = vmul.f32 %v235, %v307
        %v365 = vmul.f32 %v236, %v307
        %v366 = vmul.f32 %v237, %v307
        %v367 = vmul.f32 %v238, %v307
        %v368 = vmul.f32 %v239, %v307
        %v369 = vmul.f32 %v240, %v307
        %v370 = vmul.f32 %v241, %v307
        %v371 = vmul.f32 %v242, %v307
        %v372 = vmul.f32 %v243, %v307
        %v373 = vmul.f32 %v244, %v307
        %v374 = vmul.f32 %v245, %v307
        %v375 = vmul.f32 %v246, %v307
        %v376 = vmul.f32 %v247, %v307
        %v377 = vmul.f32 %v248, %v307
        %v378 = vmul.f32 %v249, %v307
        %v379 = vmul.f32 %v250, %v307
        %v380 = vmul.f32 %v251, %v307
        %v381 = vmul.f32 %v252, %v307
        %v382 = vmul.f32 %v253, %v307
        %v383 = vmul.f32 %v254, %v307
        %v384 = vmul.f32 %v255, %v307
        %v385 = vmul.f32 %v256, %v307
        %v386 = vmul.f32 %v257, %v307
        %v387 = vmul.f32 %v258, %v307
        %v388 = vmul.f32 %v259, %v307
        %v389 = vmul.f32 %v260, %v307
        %v390 = vmul.f32 %v261, %v307
        %v391 = vmul.f32 %v262, %v307
        %v392 = vmul.f32 %v263, %v307
        %v393 = vmul.f32 %v264, %v307
        %v394 = vmul.f32 %v265, %v307
        %v395 = vmul.f32 %v266, %v307
        %v396 = vmul.f32 %v267, %v307
        %v397 = vmul.f32 %v268, %v307
        %v398 = vmul.f32 %v269, %v307
        %v399 = vmul.f32 %v270, %v307
        %v400 = vmul.f32 %v271, %v307
        %v401 = vmul.f32 %v272, %v307
        %v402 = vmul.f32 %v273, %v307
        %v403 = vmul.f32 %v274, %v307
        %v404 = vmul.f32 %v275, %v307
        %v405 = vmul.f32 %v276, %v307
        %v406 = vmul.f32 %v277, %v307
        %v407 = vmul.f32 %v278, %v307
        %v408 = vmul.f32 %v279, %v307
        %v409 = vmul.f32 %v280, %v307
        %v410 = vmul.f32 %v281, %v307
        %v411 = vmul.f32 %v282, %v307
        %v412 = vmul.f32 %v283, %v307
        %v413 = vmul.f32 %v284, %v307
        %v414 = vmul.f32 %v285, %v307
        %v415 = vmul.f32 %v286, %v307
        %v416 = vmul.f32 %v287, %v307
        %v417 = vmul.f32 %v288, %v307
        %v418 = vmul.f32 %v289, %v307
        %v419 = vmul.f32 %v290, %v307
        %v420 = vmul.f32 %v291, %v307
        %v421 = vmul.f32 %v292, %v307
        %v422 = vmul.f32 %v293, %v307
        %v423 = vmul.f32 %v294, %v307
        %v424 = vmul.f32 %v295, %v307
        %v425 = vmul.f32 %v296, %v307
        %v426 = vmul.f32 %v297, %v307
        %v427 = vmul.f32 %v298, %v307
        %v428 = vmul.f32 %v299, %v307
        %v429 = vmul.f32 %v300, %v307
        %v430 = vmul.f32 %v301, %v307
        %v431 = vmul.f32 %v302, %v307
        %v432 = vmul.f32 %v303, %v307
        %v433 = vmul.f32 %v304, %v307
        %v434 = vmul.f32 %v305, %v307
        %v435 = vmul.f32 %v306, %v307
        %v436 = vstv %s178
        %v437 = vadd.f32 %v308, %v436
        %v438 = vadd.f32 %v309, %v436
        %v439 = vadd.f32 %v310, %v436
        %v440 = vadd.f32 %v311, %v436
        %v441 = vadd.f32 %v312, %v436
        %v442 = vadd.f32 %v313, %v436
        %v443 = vadd.f32 %v314, %v436
        %v444 = vadd.f32 %v315, %v436
        %v445 = vadd.f32 %v316, %v436
        %v446 = vadd.f32 %v317, %v436
        %v447 = vadd.f32 %v318, %v436
        %v448 = vadd.f32 %v319, %v436
        %v449 = vadd.f32 %v320, %v436
        %v450 = vadd.f32 %v321, %v436
        %v451 = vadd.f32 %v322, %v436
        %v452 = vadd.f32 %v323, %v436
        %v453 = vadd.f32 %v324, %v436
        %v454 = vadd.f32 %v325, %v436
        %v455 = vadd.f32 %v326, %v436
        %v456 = vadd.f32 %v327, %v436
        %v457 = vadd.f32 %v328, %v436
        %v458 = vadd.f32 %v329, %v436
        %v459 = vadd.f32 %v330, %v436
        %v460 = vadd.f32 %v331, %v436
        %v461 = vadd.f32 %v332, %v436
        %v462 = vadd.f32 %v333, %v436
        %v463 = vadd.f32 %v334, %v436
        %v464 = vadd.f32 %v335, %v436
        %v465 = vadd.f32 %v336, %v436
        %v466 = vadd.f32 %v337, %v436
        %v467 = vadd.f32 %v338, %v436
        %v468 = vadd.f32 %v339, %v436
        %v469 = vadd.f32 %v340, %v436
        %v470 = vadd.f32 %v341, %v436
        %v471 = vadd.f32 %v342, %v436
        %v472 = vadd.f32 %v343, %v436
        %v473 = vadd.f32 %v344, %v436
        %v474 = vadd.f32 %v345, %v436
        %v475 = vadd.f32 %v346, %v436
        %v476 = vadd.f32 %v347, %v436
        %v477 = vadd.f32 %v348, %v436
        %v478 = vadd.f32 %v349, %v436
        %v479 = vadd.f32 %v350, %v436
        %v480 = vadd.f32 %v351, %v436
        %v481 = vadd.f32 %v352, %v436
        %v482 = vadd.f32 %v353, %v436
        %v483 = vadd.f32 %v354, %v436
        %v484 = vadd.f32 %v355, %v436
        %v485 = vadd.f32 %v356, %v436
        %v486 = vadd.f32 %v357, %v436
        %v487 = vadd.f32 %v358, %v436
        %v488 = vadd.f32 %v359, %v436
        %v489 = vadd.f32 %v360, %v436
        %v490 = vadd.f32 %v361, %v436
        %v491 = vadd.f32 %v362, %v436
        %v492 = vadd.f32 %v363, %v436
        %v493 = vadd.f32 %v364, %v436
        %v494 = vadd.f32 %v365, %v436
        %v495 = vadd.f32 %v366, %v436
        %v496 = vadd.f32 %v367, %v436
        %v497 = vadd.f32 %v368, %v436
        %v498 = vadd.f32 %v369, %v436
        %v499 = vadd.f32 %v370, %v436
        %v500 = vadd.f32 %v371, %v436
        %v501 = vadd.f32 %v372, %v436
        %v502 = vadd.f32 %v373, %v436
        %v503 = vadd.f32 %v374, %v436
        %v504 = vadd.f32 %v375, %v436
        %v505 = vadd.f32 %v376, %v436
        %v506 = vadd.f32 %v377, %v436
        %v507 = vadd.f32 %v378, %v436
        %v508 = vadd.f32 %v379, %v436
        %v509 = vadd.f32 %v380, %v436
        %v510 = vadd.f32 %v381, %v436
        %v511 = vadd.f32 %v382, %v436
        %v512 = vadd.f32 %v383, %v436
        %v513 = vadd.f32 %v384, %v436
        %v514 = vadd.f32 %v385, %v436
        %v515 = vadd.f32 %v386, %v436
        %v516 = vadd.f32 %v387, %v436
        %v517 = vadd.f32 %v388, %v436
        %v518 = vadd.f32 %v389, %v436
        %v519 = vadd.f32 %v390, %v436
        %v520 = vadd.f32 %v391, %v436
        %v521 = vadd.f32 %v392, %v436
        %v522 = vadd.f32 %v393, %v436
        %v523 = vadd.f32 %v394, %v436
        %v524 = vadd.f32 %v395, %v436
        %v525 = vadd.f32 %v396, %v436
        %v526 = vadd.f32 %v397, %v436
        %v527 = vadd.f32 %v398, %v436
        %v528 = vadd.f32 %v399, %v436
        %v529 = vadd.f32 %v400, %v436
        %v530 = vadd.f32 %v401, %v436
        %v531 = vadd.f32 %v402, %v436
        %v532 = vadd.f32 %v403, %v436
        %v533 = vadd.f32 %v404, %v436
        %v534 = vadd.f32 %v405, %v436
        %v535 = vadd.f32 %v406, %v436
        %v536 = vadd.f32 %v407, %v436
        %v537 = vadd.f32 %v408, %v436
        %v538 = vadd.f32 %v409, %v436
        %v539 = vadd.f32 %v410, %v436
        %v540 = vadd.f32 %v411, %v436
        %v541 = vadd.f32 %v412, %v436
        %v542 = vadd.f32 %v413, %v436
        %v543 = vadd.f32 %v414, %v436
        %v544 = vadd.f32 %v415, %v436
        %v545 = vadd.f32 %v416, %v436
        %v546 = vadd.f32 %v417, %v436
        %v547 = vadd.f32 %v418, %v436
        %v548 = vadd.f32 %v419, %v436
        %v549 = vadd.f32 %v420, %v436
        %v550 = vadd.f32 %v421, %v436
        %v551 = vadd.f32 %v422, %v436
        %v552 = vadd.f32 %v423, %v436
        %v553 = vadd.f32 %v424, %v436
        %v554 = vadd.f32 %v425, %v436
        %v555 = vadd.f32 %v426, %v436
        %v556 = vadd.f32 %v427, %v436
        %v557 = vadd.f32 %v428, %v436
        %v558 = vadd.f32 %v429, %v436
        %v559 = vadd.f32 %v430, %v436
        %v560 = vadd.f32 %v431, %v436
        %v561 = vadd.f32 %v432, %v436
        %v562 = vadd.f32 %v433, %v436
        %v563 = vadd.f32 %v434, %v436
        %v564 = vadd.f32 %v435, %v436
        %565 = vst [vmem:[%s174] sm:$0xff] %v437
        %566 = vst [vmem:[%s174 + $0x8] sm:$0xff] %v438
        %567 = vst [vmem:[%s174 + $0x10] sm:$0xff] %v439
        %568 = vst [vmem:[%s174 + $0x18] sm:$0xff] %v440
        %569 = vst [vmem:[%s174 + $0x20] sm:$0xff] %v441
        %570 = vst [vmem:[%s174 + $0x28] sm:$0xff] %v442
        %571 = vst [vmem:[%s174 + $0x30] sm:$0xff] %v443
        %572 = vst [vmem:[%s174 + $0x38] sm:$0xff] %v444
        %573 = vst [vmem:[%s174 + $0x40] sm:$0xff] %v445
        %574 = vst [vmem:[%s174 + $0x48] sm:$0xff] %v446
        %575 = vst [vmem:[%s174 + $0x50] sm:$0xff] %v447
        %576 = vst [vmem:[%s174 + $0x58] sm:$0xff] %v448
        %577 = vst [vmem:[%s174 + $0x60] sm:$0xff] %v449
        %578 = vst [vmem:[%s174 + $0x68] sm:$0xff] %v450
        %579 = vst [vmem:[%s174 + $0x70] sm:$0xff] %v451
        %580 = vst [vmem:[%s174 + $0x78] sm:$0xff] %v452
        %581 = vst [vmem:[%s174 + $0x80] sm:$0xff] %v453
        %582 = vst [vmem:[%s174 + $0x88] sm:$0xff] %v454
        %583 = vst [vmem:[%s174 + $0x90] sm:$0xff] %v455
        %584 = vst [vmem:[%s174 + $0x98] sm:$0xff] %v456
        %585 = vst [vmem:[%s174 + $0xa0] sm:$0xff] %v457
        %586 = vst [vmem:[%s174 + $0xa8] sm:$0xff] %v458
        %587 = vst [vmem:[%s174 + $0xb0] sm:$0xff] %v459
        %588 = vst [vmem:[%s174 + $0xb8] sm:$0xff] %v460
        %589 = vst [vmem:[%s174 + $0xc0] sm:$0xff] %v461
        %590 = vst [vmem:[%s174 + $0xc8] sm:$0xff] %v462
        %591 = vst [vmem:[%s174 + $0xd0] sm:$0xff] %v463
        %592 = vst [vmem:[%s174 + $0xd8] sm:$0xff] %v464
        %593 = vst [vmem:[%s174 + $0xe0] sm:$0xff] %v465
        %594 = vst [vmem:[%s174 + $0xe8] sm:$0xff] %v466
        %595 = vst [vmem:[%s174 + $0xf0] sm:$0xff] %v467
        %596 = vst [vmem:[%s174 + $0xf8] sm:$0xff] %v468
        %597 = vst [vmem:[%s174 + $0x100] sm:$0xff] %v469
        %598 = vst [vmem:[%s174 + $0x108] sm:$0xff] %v470
        %599 = vst [vmem:[%s174 + $0x110] sm:$0xff] %v471
        %600 = vst [vmem:[%s174 + $0x118] sm:$0xff] %v472
        %601 = vst [vmem:[%s174 + $0x120] sm:$0xff] %v473
        %602 = vst [vmem:[%s174 + $0x128] sm:$0xff] %v474
        %603 = vst [vmem:[%s174 + $0x130] sm:$0xff] %v475
        %604 = vst [vmem:[%s174 + $0x138] sm:$0xff] %v476
        %605 = vst [vmem:[%s174 + $0x140] sm:$0xff] %v477
        %606 = vst [vmem:[%s174 + $0x148] sm:$0xff] %v478
        %607 = vst [vmem:[%s174 + $0x150] sm:$0xff] %v479
        %608 = vst [vmem:[%s174 + $0x158] sm:$0xff] %v480
        %609 = vst [vmem:[%s174 + $0x160] sm:$0xff] %v481
        %610 = vst [vmem:[%s174 + $0x168] sm:$0xff] %v482
        %611 = vst [vmem:[%s174 + $0x170] sm:$0xff] %v483
        %612 = vst [vmem:[%s174 + $0x178] sm:$0xff] %v484
        %613 = vst [vmem:[%s174 + $0x180] sm:$0xff] %v485
        %614 = vst [vmem:[%s174 + $0x188] sm:$0xff] %v486
        %615 = vst [vmem:[%s174 + $0x190] sm:$0xff] %v487
        %616 = vst [vmem:[%s174 + $0x198] sm:$0xff] %v488
        %617 = vst [vmem:[%s174 + $0x1a0] sm:$0xff] %v489
        %618 = vst [vmem:[%s174 + $0x1a8] sm:$0xff] %v490
        %619 = vst [vmem:[%s174 + $0x1b0] sm:$0xff] %v491
        %620 = vst [vmem:[%s174 + $0x1b8] sm:$0xff] %v492
        %621 = vst [vmem:[%s174 + $0x1c0] sm:$0xff] %v493
        %622 = vst [vmem:[%s174 + $0x1c8] sm:$0xff] %v494
        %623 = vst [vmem:[%s174 + $0x1d0] sm:$0xff] %v495
        %624 = vst [vmem:[%s174 + $0x1d8] sm:$0xff] %v496
        %625 = vst [vmem:[%s174 + $0x1e0] sm:$0xff] %v497
        %626 = vst [vmem:[%s174 + $0x1e8] sm:$0xff] %v498
        %627 = vst [vmem:[%s174 + $0x1f0] sm:$0xff] %v499
        %628 = vst [vmem:[%s174 + $0x1f8] sm:$0xff] %v500
        %629 = vst [vmem:[%s174 + $0x200] sm:$0xff] %v501
        %630 = vst [vmem:[%s174 + $0x208] sm:$0xff] %v502
        %631 = vst [vmem:[%s174 + $0x210] sm:$0xff] %v503
        %632 = vst [vmem:[%s174 + $0x218] sm:$0xff] %v504
        %633 = vst [vmem:[%s174 + $0x220] sm:$0xff] %v505
        %634 = vst [vmem:[%s174 + $0x228] sm:$0xff] %v506
        %635 = vst [vmem:[%s174 + $0x230] sm:$0xff] %v507
        %636 = vst [vmem:[%s174 + $0x238] sm:$0xff] %v508
        %637 = vst [vmem:[%s174 + $0x240] sm:$0xff] %v509
        %638 = vst [vmem:[%s174 + $0x248] sm:$0xff] %v510
        %639 = vst [vmem:[%s174 + $0x250] sm:$0xff] %v511
        %640 = vst [vmem:[%s174 + $0x258] sm:$0xff] %v512
        %641 = vst [vmem:[%s174 + $0x260] sm:$0xff] %v513
        %642 = vst [vmem:[%s174 + $0x268] sm:$0xff] %v514
        %643 = vst [vmem:[%s174 + $0x270] sm:$0xff] %v515
        %644 = vst [vmem:[%s174 + $0x278] sm:$0xff] %v516
        %645 = vst [vmem:[%s174 + $0x280] sm:$0xff] %v517
        %646 = vst [vmem:[%s174 + $0x288] sm:$0xff] %v518
        %647 = vst [vmem:[%s174 + $0x290] sm:$0xff] %v519
        %648 = vst [vmem:[%s174 + $0x298] sm:$0xff] %v520
        %649 = vst [vmem:[%s174 + $0x2a0] sm:$0xff] %v521
        %650 = vst [vmem:[%s174 + $0x2a8] sm:$0xff] %v522
        %651 = vst [vmem:[%s174 + $0x2b0] sm:$0xff] %v523
        %652 = vst [vmem:[%s174 + $0x2b8] sm:$0xff] %v524
        %653 = vst [vmem:[%s174 + $0x2c0] sm:$0xff] %v525
        %654 = vst [vmem:[%s174 + $0x2c8] sm:$0xff] %v526
        %655 = vst [vmem:[%s174 + $0x2d0] sm:$0xff] %v527
        %656 = vst [vmem:[%s174 + $0x2d8] sm:$0xff] %v528
        %657 = vst [vmem:[%s174 + $0x2e0] sm:$0xff] %v529
        %658 = vst [vmem:[%s174 + $0x2e8] sm:$0xff] %v530
        %659 = vst [vmem:[%s174 + $0x2f0] sm:$0xff] %v531
        %660 = vst [vmem:[%s174 + $0x2f8] sm:$0xff] %v532
        %661 = vst [vmem:[%s174 + $0x300] sm:$0xff] %v533
        %662 = vst [vmem:[%s174 + $0x308] sm:$0xff] %v534
        %663 = vst [vmem:[%s174 + $0x310] sm:$0xff] %v535
        %664 = vst [vmem:[%s174 + $0x318] sm:$0xff] %v536
        %665 = vst [vmem:[%s174 + $0x320] sm:$0xff] %v537
        %666 = vst [vmem:[%s174 + $0x328] sm:$0xff] %v538
        %667 = vst [vmem:[%s174 + $0x330] sm:$0xff] %v539
        %668 = vst [vmem:[%s174 + $0x338] sm:$0xff] %v540
        %669 = vst [vmem:[%s174 + $0x340] sm:$0xff] %v541
        %670 = vst [vmem:[%s174 + $0x348] sm:$0xff] %v542
        %671 = vst [vmem:[%s174 + $0x350] sm:$0xff] %v543
        %672 = vst [vmem:[%s174 + $0x358] sm:$0xff] %v544
        %673 = vst [vmem:[%s174 + $0x360] sm:$0xff] %v545
        %674 = vst [vmem:[%s174 + $0x368] sm:$0xff] %v546
        %675 = vst [vmem:[%s174 + $0x370] sm:$0xff] %v547
        %676 = vst [vmem:[%s174 + $0x378] sm:$0xff] %v548
        %677 = vst [vmem:[%s174 + $0x380] sm:$0xff] %v549
        %678 = vst [vmem:[%s174 + $0x388] sm:$0xff] %v550
        %679 = vst [vmem:[%s174 + $0x390] sm:$0xff] %v551
        %680 = vst [vmem:[%s174 + $0x398] sm:$0xff] %v552
        %681 = vst [vmem:[%s174 + $0x3a0] sm:$0xff] %v553
        %682 = vst [vmem:[%s174 + $0x3a8] sm:$0xff] %v554
        %683 = vst [vmem:[%s174 + $0x3b0] sm:$0xff] %v555
        %684 = vst [vmem:[%s174 + $0x3b8] sm:$0xff] %v556
        %685 = vst [vmem:[%s174 + $0x3c0] sm:$0xff] %v557
        %686 = vst [vmem:[%s174 + $0x3c8] sm:$0xff] %v558
        %687 = vst [vmem:[%s174 + $0x3d0] sm:$0xff] %v559
        %688 = vst [vmem:[%s174 + $0x3d8] sm:$0xff] %v560
        %689 = vst [vmem:[%s174 + $0x3e0] sm:$0xff] %v561
        %690 = vst [vmem:[%s174 + $0x3e8] sm:$0xff] %v562
        %691 = vst [vmem:[%s174 + $0x3f0] sm:$0xff] %v563
        %692 = vst [vmem:[%s174 + $0x3f8] sm:$0xff] %v564
        %s693 = sand.u32 %s75, 1
        %s694 = scalar_lea.sflag [#allocation4], %s693
        %s695 = sand.u32 %s75, 1
        %s696 = smul.addr %s695, 1024
        %s697 = scalar_lea.vmem [#allocation7], %s696
        // Predicated region
        $region37: #{tpu_custom_call.1} parent=27 // pred_check
          %p698 = pneg %p85
        $region38: #{tpu_custom_call.1} parent=27 // pred_check_branch
          %700 = sbr.rel (%p698) target = $region40
        $region39: #{tpu_custom_call.1} parent=27 // pred_region
          %s701 = smul.u32 16, %s20
          %s703 = ssub.s32 16384, 16384
          %704 = vsyncadd %s694, %s703
          %s705 = smul.addr %s701, 8
          %s706 = smul.addr %s705, 128
          %s707 = scalar_lea.hbm %s2, %s706
          %s708 = sshll.u32 %s697, 4
          %s709 = int_to_ptr.vmem [resolvable:$true] %s708
          %714 = dma.vmem_to_hbm [thread:$0]  %s709, 16384, %s707, %s694, 1024, 1024, 64
        $region40: #{tpu_custom_call.1} parent=27 // pred_fallthru
          _
      $region28: #{tpu_custom_call.1} parent=5 // pred_fallthru
        _
      %p715 = scmp.le.s32.totalorder 2, %s15
      // Predicated region
      $region41: #{tpu_custom_call.1} parent=5 // pred_check
        %p716 = pneg %p715
      $region42: #{tpu_custom_call.1} parent=5 // pred_check_branch
        %718 = sbr.rel (%p716) target = $region44
      $region43: #{tpu_custom_call.1} parent=5 // pred_region
        %s719 = ssub.s32 %s15, 2
        // Predicated region
        $region45: #{tpu_custom_call.1} parent=43 // pred_check
          %p720 = pneg %p91
        $region46: #{tpu_custom_call.1} parent=43 // pred_check_branch
          %722 = sbr.rel (%p720) target = $region48
        $region47: #{tpu_custom_call.1} parent=43 // pred_region
          %s723 = sand.u32 %s76, 1
          %s724 = scalar_lea.sflag [#allocation4], %s723
          %s725 = sand.u32 %s76, 1
          %s726 = smul.addr %s725, 1024
          %s727 = scalar_lea.vmem [#allocation7], %s726
          %728 = dma.done %s724, 16384
        $region48: #{tpu_custom_call.1} parent=43 // pred_fallthru
          _
      $region44: #{tpu_custom_call.1} parent=5 // pred_fallthru
        _
    $region6: #{tpu_custom_call.1} parent=1 // loop_footer
      %s19 = sadd.s32 1, %s15
    $region7: #{tpu_custom_call.1} parent=1 // loop_footer_branch
      %14 = sbr.rel target = $region3
    $region8: #{tpu_custom_call.1} parent=1 // loop_exit
      _
    %729 = vsyncpa [#allocation3], 1
    %s730 = scalar_lea.sflag [#allocation3], 1
    %731 = vsyncpa %s730, 1
    %732 = vsyncpa [#allocation4], 1
    %s733 = scalar_lea.sflag [#allocation4], 1
    %734 = vsyncpa %s733, 1
    %735 = vsyncpa [#allocation5], 1
    %s736 = scalar_lea.sflag [#allocation5], 1
    %737 = vsyncpa %s736, 1

</llo_original>
